<compile_context>
chip_gen: v6e
topology: v6e:2x2x1
jax: 0.10.0
libtpu: 0.0.40
codegen_flags: <defaults>
</compile_context>

<pallas_src>
import functools

import jax
import jax.numpy as jnp
from jax import lax
from jax.experimental import pallas as pl
from jax.experimental.pallas import tpu as pltpu


def _round_up(x, m):
    return (x + m - 1) // m * m


# ---------------------------------------------------------------------------
# Pass 1: conv (one K = KH*KW*Cin matmul per row tile) + per-tile BN statistics.
# ---------------------------------------------------------------------------
def _conv_stats_kernel(patches_ref, w_ref, conv_ref, tsum_ref, tssq_ref, *,
                       tile_rows, n_valid_rows):
    i = pl.program_id(0)

    # Single MXU matmul with the 9 taps folded into the contraction dimension.
    acc = jnp.dot(patches_ref[...], w_ref[...],
                  preferred_element_type=jnp.float32)
    conv_ref[...] = acc

    # Mask padded rows out of the batch statistics (rows may be padded up to a
    # multiple of tile_rows).
    row = i * tile_rows + lax.broadcasted_iota(jnp.int32, acc.shape, 0)
    mask = (row < n_valid_rows).astype(jnp.float32)
    cnt = jnp.maximum(jnp.minimum(tile_rows, n_valid_rows - i * tile_rows), 1)
    cnt = cnt.astype(jnp.float32)

    acc_m = acc * mask
    s = jnp.sum(acc_m, axis=0, keepdims=True)                  # (1, Cout_pad)
    tile_mean = s * (1.0 / cnt)
    d = (acc - tile_mean) * mask
    ssq = jnp.sum(d * d, axis=0, keepdims=True)                # (1, Cout_pad)

    # Stats outputs carry an 8-sublane block for layout friendliness; the
    # wrapper reads sublane 0.
    tsum_ref[...] = jnp.broadcast_to(s[None], tsum_ref.shape)
    tssq_ref[...] = jnp.broadcast_to(ssq[None], tssq_ref.shape)


# ---------------------------------------------------------------------------
# Pass 2: apply BatchNorm (train-mode stats) + ReLU, tile by tile.
# ---------------------------------------------------------------------------
def _bn_relu_kernel(conv_ref, mean_ref, inv_ref, out_ref):
    y = (conv_ref[...] - mean_ref[...]) * inv_ref[...]
    out_ref[...] = jnp.maximum(y, 0.0)


def conv_bn_relu(x_nchw, w_oihw, bias=None, *, stride=1, padding=1, eps=1e-5,
                 tile_rows=None):
    """Forward pass of ConvBNRelu for the module defaults (stridex=1, k=3, pad=1)."""
    assert stride == 1, "kernel implements the module default stridex=1"
    N, Cin, H, W = x_nchw.shape
    Cout, Cin2, KH, KW = w_oihw.shape
    assert Cin == Cin2
    # Train-mode BN (gamma=1, beta=0) exactly cancels a per-channel constant
    # conv bias, so the bias is intentionally not used by the kernel.
    del bias

    rows = N * H * W
    k9 = KH * KW * Cin
    cout_pad = _round_up(Cout, 128)          # lane-dense output stores

    if tile_rows is None:
        tile_rows = min(1024, _round_up(rows, 8))
    rows_pad = _round_up(rows, tile_rows)
    nt = rows_pad // tile_rows

    # --- glue (plain JAX, pure data movement): im2col with taps folded into
    #     the contraction dim; weight reshaped to [9*Cin, Cout_pad]. ---
    x_nhwc = jnp.transpose(x_nchw, (0, 2, 3, 1))
    x_pad = jnp.pad(x_nhwc, ((0, 0), (padding, padding), (padding, padding), (0, 0)))
    taps = [x_pad[:, ky:ky + H, kx:kx + W, :]
            for ky in range(KH) for kx in range(KW)]
    patches = jnp.concatenate(taps, axis=-1).reshape(rows, k9)
    if rows_pad != rows:
        patches = jnp.pad(patches, ((0, rows_pad - rows), (0, 0)))

    w2d = jnp.transpose(w_oihw, (2, 3, 1, 0)).reshape(k9, Cout)
    if cout_pad != Cout:
        w2d = jnp.pad(w2d, ((0, 0), (0, cout_pad - Cout)))

    cparams = pltpu.CompilerParams(
        dimension_semantics=("parallel",),
        vmem_limit_bytes=32 * 1024 * 1024,
    )

    kernel1 = functools.partial(
        _conv_stats_kernel, tile_rows=tile_rows, n_valid_rows=rows)
    conv_out, tsum, tssq = pl.pallas_call(
        kernel1,
        grid=(nt,),
        in_specs=[
            pl.BlockSpec((tile_rows, k9), lambda i: (i, 0)),
            pl.BlockSpec((k9, cout_pad), lambda i: (0, 0)),
        ],
        out_specs=(
            pl.BlockSpec((tile_rows, cout_pad), lambda i: (i, 0)),
            pl.BlockSpec((1, 8, cout_pad), lambda i: (i, 0, 0)),
            pl.BlockSpec((1, 8, cout_pad), lambda i: (i, 0, 0)),
        ),
        out_shape=(
            jax.ShapeDtypeStruct((rows_pad, cout_pad), jnp.float32),
            jax.ShapeDtypeStruct((nt, 8, cout_pad), jnp.float32),
            jax.ShapeDtypeStruct((nt, 8, cout_pad), jnp.float32),
        ),
        compiler_params=cparams,
    )(patches, w2d)

    # --- combine per-tile stats with Chan's parallel variance (tiny arrays,
    #     plain JAX). Biased variance, matching BatchNorm's normalization. ---
    tsum = tsum[:, 0, :]                                        # (nt, Cout_pad)
    tssq = tssq[:, 0, :]
    counts = jnp.minimum(tile_rows, rows - jnp.arange(nt) * tile_rows)
    counts = counts.astype(jnp.float32)[:, None]
    tile_means = tsum / counts
    mean = jnp.sum(tsum, axis=0, keepdims=True) / float(rows)   # (1, Cout_pad)
    var = (jnp.sum(tssq, axis=0, keepdims=True)
           + jnp.sum(counts * (tile_means - mean) ** 2, axis=0, keepdims=True)
           ) / float(rows)
    inv = lax.rsqrt(var + eps)

    y2d = pl.pallas_call(
        _bn_relu_kernel,
        grid=(nt,),
        in_specs=[
            pl.BlockSpec((tile_rows, cout_pad), lambda i: (i, 0)),
            pl.BlockSpec((1, cout_pad), lambda i: (0, 0)),
            pl.BlockSpec((1, cout_pad), lambda i: (0, 0)),
        ],
        out_specs=pl.BlockSpec((tile_rows, cout_pad), lambda i: (i, 0)),
        out_shape=jax.ShapeDtypeStruct((rows_pad, cout_pad), jnp.float32),
        input_output_aliases={0: 0},
        compiler_params=cparams,
    )(conv_out, mean, inv)

    y = y2d[:rows, :Cout].reshape(N, H, W, Cout).astype(x_nchw.dtype)
    return jnp.transpose(y, (0, 3, 1, 2))                       # back to NCHW


def _reference(x, w, b, eps=1e-5):
    """Pure-JAX reference (XLA conv) for correctness checking."""
    y = lax.conv_general_dilated(
        x, w, window_strides=(1, 1), padding=((1, 1), (1, 1)),
        dimension_numbers=("NCHW", "OIHW", "NCHW"))
    y = y + b.reshape(1, -1, 1, 1)
    mean = jnp.mean(y, axis=(0, 2, 3), keepdims=True)
    var = jnp.mean((y - mean) ** 2, axis=(0, 2, 3), keepdims=True)
    y = (y - mean) * lax.rsqrt(var + eps)
    return jnp.maximum(y, 0.0)


if __name__ == "__main__":
    key = jax.random.PRNGKey(0)
    N, Cin, Cout, H, W = 2, 4, 8, 16, 16     # channelx = (4, 8)
    KH = KW = 3

    x = jax.random.normal(jax.random.fold_in(key, 0), (N, Cin, H, W), jnp.float32)

    # Deterministic parameter init matching kaiming_w_init:
    #   kaiming_normal_(weight, nonlinearity='relu') -> std = sqrt(2 / fan_in)
    #   bias.fill_(0.01)
    fan_in = Cin * KH * KW
    std = (2.0 / fan_in) ** 0.5
    w = std * jax.random.normal(jax.random.fold_in(key, 1),
                                (Cout, Cin, KH, KW), jnp.float32)
    b = jnp.full((Cout,), 0.01, jnp.float32)

    out = jax.block_until_ready(conv_bn_relu(x, w, b))
    ref = _reference(x, w, b)

    assert out.shape == (N, Cout, H, W)
    max_err = float(jnp.max(jnp.abs(out - ref)))
    assert jnp.allclose(out, ref, atol=1e-4, rtol=1e-4), max_err
    print("KERNEL_OK")
</pallas_src>

<mosaic_0001>
module attributes {stable_mosaic.version = 11 : i64} {
  func.func @_conv_stats_kernel(%arg0: i32, %arg1: memref<512x36xf32, #tpu.memory_space<vmem>>, %arg2: memref<36x128xf32, #tpu.memory_space<vmem>>, %arg3: memref<512x128xf32, #tpu.memory_space<vmem>>, %arg4: memref<1x8x128xf32, #tpu.memory_space<vmem>>, %arg5: memref<1x8x128xf32, #tpu.memory_space<vmem>>) attributes {dimension_semantics = [#tpu.dimension_semantics<parallel>], iteration_bounds = array<i64: 1>, scalar_prefetch = 0 : i64, scratch_operands = 0 : i64, tpu.core_type = #tpu.core_type<tc>, window_params = [{transform_indices = @transform_0, window_bounds = array<i64: 512, 36>}, {pipeline_mode = #tpu.pipeline_mode<synchronous>, transform_indices = @transform_1, window_bounds = array<i64: 36, 128>}, {transform_indices = @transform_2, window_bounds = array<i64: 512, 128>}, {transform_indices = @transform_3, window_bounds = array<i64: 1, 8, 128>}, {transform_indices = @transform_4, window_bounds = array<i64: 1, 8, 128>}]} {
    %c0 = arith.constant 0 : index
    %c0_0 = arith.constant 0 : index
    %0 = vector.load %arg1[%c0, %c0_0] : memref<512x36xf32, #tpu.memory_space<vmem>>, vector<512x36xf32>
    %c0_1 = arith.constant 0 : index
    %c0_2 = arith.constant 0 : index
    %1 = vector.load %arg2[%c0_1, %c0_2] : memref<36x128xf32, #tpu.memory_space<vmem>>, vector<36x128xf32>
    %cst = arith.constant dense<0.000000e+00> : vector<512x128xf32>
    %2 = tpu.matmul %0, %1, %cst {dimension_numbers = #tpu.dot_dimension_numbers<[1], [0], [0], [1], [0, 0, 1, 1], [], []>} : vector<512x36xf32>, vector<36x128xf32>, vector<512x128xf32> -> vector<512x128xf32>
    %c0_3 = arith.constant 0 : index
    %c0_4 = arith.constant 0 : index
    %3 = vector.load %arg3[%c0_3, %c0_4] : memref<512x128xf32, #tpu.memory_space<vmem>>, vector<512x128xf32>
    tpu.vector_store %arg3[%c0_3, %c0_4], %2 {strides = array<i32>} : memref<512x128xf32, #tpu.memory_space<vmem>>, vector<512x128xf32>,
    %c512_i32 = arith.constant 512 : i32
    %4 = arith.muli %arg0, %c512_i32 : i32
    %5 = tpu.iota {dimensions = array<i32: 0>} : vector<512x128xi32>
    %6 = vector.broadcast %4 : i32 to vector<512x128xi32>
    %7 = arith.addi %6, %5 : vector<512x128xi32>
    %c512_i32_5 = arith.constant 512 : i32
    %8 = vector.broadcast %c512_i32_5 : i32 to vector<512x128xi32>
    %9 = arith.cmpi slt, %7, %8 : vector<512x128xi32>
    %10 = arith.extui %9 : vector<512x128xi1> to vector<512x128xi32>
    %11 = arith.sitofp %10 : vector<512x128xi32> to vector<512x128xf32>
    %c512_i32_6 = arith.constant 512 : i32
    %12 = arith.muli %arg0, %c512_i32_6 : i32
    %c512_i32_7 = arith.constant 512 : i32
    %13 = arith.subi %c512_i32_7, %12 : i32
    %c512_i32_8 = arith.constant 512 : i32
    %14 = arith.minsi %c512_i32_8, %13 : i32
    %c1_i32 = arith.constant 1 : i32
    %15 = arith.maxsi %14, %c1_i32 : i32
    %16 = arith.sitofp %15 : i32 to f32
    %17 = arith.mulf %2, %11 : vector<512x128xf32>
    %cst_9 = arith.constant dense<0.000000e+00> : vector<128xf32>
    %18 = vector.multi_reduction <add>, %17, %cst_9 [0] : vector<512x128xf32> to vector<128xf32>
    %19 = vector.shape_cast %18 : vector<128xf32> to vector<1x128xf32>
    %cst_10 = arith.constant 1.000000e+00 : f32
    %20 = arith.divf %cst_10, %16 : f32
    %21 = vector.broadcast %20 : f32 to vector<1x128xf32>
    %22 = arith.mulf %19, %21 : vector<1x128xf32>
    %23 = vector.broadcast %22 : vector<1x128xf32> to vector<512x128xf32>
    %24 = arith.subf %2, %23 : vector<512x128xf32>
    %25 = arith.mulf %24, %11 : vector<512x128xf32>
    %26 = arith.mulf %25, %25 : vector<512x128xf32>
    %cst_11 = arith.constant dense<0.000000e+00> : vector<128xf32>
    %27 = vector.multi_reduction <add>, %26, %cst_11 [0] : vector<512x128xf32> to vector<128xf32>
    %28 = vector.shape_cast %27 : vector<128xf32> to vector<1x128xf32>
    %29 = vector.shape_cast %19 : vector<1x128xf32> to vector<1x1x128xf32>
    %30 = vector.shape_cast %29 : vector<1x1x128xf32> to vector<1x1x128xf32>
    %31 = vector.broadcast %30 : vector<1x1x128xf32> to vector<1x8x128xf32>
    %c0_12 = arith.constant 0 : index
    %c0_13 = arith.constant 0 : index
    %c0_14 = arith.constant 0 : index
    %32 = vector.load %arg4[%c0_12, %c0_13, %c0_14] : memref<1x8x128xf32, #tpu.memory_space<vmem>>, vector<1x8x128xf32>
    tpu.vector_store %arg4[%c0_12, %c0_13, %c0_14], %31 {strides = array<i32>} : memref<1x8x128xf32, #tpu.memory_space<vmem>>, vector<1x8x128xf32>,
    %33 = vector.shape_cast %28 : vector<1x128xf32> to vector<1x1x128xf32>
    %34 = vector.shape_cast %33 : vector<1x1x128xf32> to vector<1x1x128xf32>
    %35 = vector.broadcast %34 : vector<1x1x128xf32> to vector<1x8x128xf32>
    %c0_15 = arith.constant 0 : index
    %c0_16 = arith.constant 0 : index
    %c0_17 = arith.constant 0 : index
    %36 = vector.load %arg5[%c0_15, %c0_16, %c0_17] : memref<1x8x128xf32, #tpu.memory_space<vmem>>, vector<1x8x128xf32>
    tpu.vector_store %arg5[%c0_15, %c0_16, %c0_17], %35 {strides = array<i32>} : memref<1x8x128xf32, #tpu.memory_space<vmem>>, vector<1x8x128xf32>,
    return
  }
  func.func @transform_0(%arg0: i32) -> (i32, i32) {
    %c0_i32 = arith.constant 0 : i32
    %c0_i32_0 = arith.constant 0 : i32
    return %arg0, %c0_i32 : i32, i32
  }
  func.func @transform_1(%arg0: i32) -> (i32, i32) {
    %c0_i32 = arith.constant 0 : i32
    %c0_i32_0 = arith.constant 0 : i32
    %c0_i32_1 = arith.constant 0 : i32
    return %c0_i32, %c0_i32_0 : i32, i32
  }
  func.func @transform_2(%arg0: i32) -> (i32, i32) {
    %c0_i32 = arith.constant 0 : i32
    %c0_i32_0 = arith.constant 0 : i32
    return %arg0, %c0_i32 : i32, i32
  }
  func.func @transform_3(%arg0: i32) -> (i32, i32, i32) {
    %c0_i32 = arith.constant 0 : i32
    %c0_i32_0 = arith.constant 0 : i32
    %c0_i32_1 = arith.constant 0 : i32
    return %arg0, %c0_i32, %c0_i32_0 : i32, i32, i32
  }
  func.func @transform_4(%arg0: i32) -> (i32, i32, i32) {
    %c0_i32 = arith.constant 0 : i32
    %c0_i32_0 = arith.constant 0 : i32
    %c0_i32_1 = arith.constant 0 : i32
    return %arg0, %c0_i32, %c0_i32_0 : i32, i32, i32
  }
}

</mosaic_0001>

<llo_original>
// kernel: tpu_custom_call.1
$region0: #{tpu_custom_call.1}
  #allocation0 [shape = 'u32[]', space=smem, size = 0x4, offset = 0x4, fixed_abs, tag = 'smem constant byte address 0x4 - core index']
  #allocation1 [shape = 'u32[144,128]{1,0:T(1,128)}', space=vmem, size = 0x12000, scoped, tag = 'internal scratch']
  %s0 = inlined_call_operand.vmem [shape: f32[512,36], index: 0, kind: input, shape index: {}]
  %s1 = inlined_call_operand.vmem [shape: f32[36,128], index: 1, kind: input, shape index: {}]
  %s2 = inlined_call_operand.hbm [shape: f32[512,128], index: 2, kind: output, shape index: {0}]
  %s3 = inlined_call_operand.hbm [shape: f32[1,8,128], index: 3, kind: output, shape index: {1}]
  %s4 = inlined_call_operand.hbm [shape: f32[1,8,128], index: 4, kind: output, shape index: {2}]
  %5 = xla_tuple %s2, %s3, %s4
  %s6 = sld [smem:[#allocation0]]
  $region34: #{tpu_custom_call.1} parent=0
    _
  %s8 = ssub.s32 1, %s6
  %s9 = scalar_select 0, %s8, %s6
  $region1: #{tpu_custom_call.1} parent=0
    #allocation2 [shape = 'u8[262144]{0}', space=vmem, size = 0x40000, scoped, tag = 'output window, operand 0, single buffered']
    #allocation3 [shape = 's32[1]{0}', space=sflag, size = 0x4, scoped, tag = 'scoped memory for tpu_custom_call.1']
    #allocation4 [shape = 'u8[4096]{0}', space=vmem, size = 0x1000, scoped, tag = 'output window, operand 1, single buffered']
    #allocation5 [shape = 's32[1]{0}', space=sflag, size = 0x4, scoped, tag = 'scoped memory for tpu_custom_call.1']
    #allocation6 [shape = 'u8[4096]{0}', space=vmem, size = 0x1000, scoped, tag = 'output window, operand 2, single buffered']
    %10 = vsyncpa [#allocation3], 0
    %11 = vsyncpa [#allocation5], 0
    // Predicated region
    $region2: #{tpu_custom_call.1} parent=1 // pred_check
      _
    $region3: #{tpu_custom_call.1} parent=1 // pred_check_branch
      %13 = sbr.rel (0) target = $region5
    $region4: #{tpu_custom_call.1} parent=1 // pred_region
      _
    $region5: #{tpu_custom_call.1} parent=1 // pred_fallthru
      _
    // Predicated region
    $region6: #{tpu_custom_call.1} parent=1 // pred_check
      _
    $region7: #{tpu_custom_call.1} parent=1 // pred_check_branch
      %15 = sbr.rel (0) target = $region9
    $region8: #{tpu_custom_call.1} parent=1 // pred_region
      _
    $region9: #{tpu_custom_call.1} parent=1 // pred_fallthru
      _
    %v16 = vld [vmem:[%s0] sm:$0xff]
    %v17 = vld [vmem:[%s0 + $0x8] sm:$0xff]
    %v18 = vld [vmem:[%s0 + $0x10] sm:$0xff]
    %v19 = vld [vmem:[%s0 + $0x18] sm:$0xff]
    %v20 = vld [vmem:[%s0 + $0x20] sm:$0xff]
    %v21 = vld [vmem:[%s0 + $0x28] sm:$0xff]
    %v22 = vld [vmem:[%s0 + $0x30] sm:$0xff]
    %v23 = vld [vmem:[%s0 + $0x38] sm:$0xff]
    %v24 = vld [vmem:[%s0 + $0x40] sm:$0xff]
    %v25 = vld [vmem:[%s0 + $0x48] sm:$0xff]
    %v26 = vld [vmem:[%s0 + $0x50] sm:$0xff]
    %v27 = vld [vmem:[%s0 + $0x58] sm:$0xff]
    %v28 = vld [vmem:[%s0 + $0x60] sm:$0xff]
    %v29 = vld [vmem:[%s0 + $0x68] sm:$0xff]
    %v30 = vld [vmem:[%s0 + $0x70] sm:$0xff]
    %v31 = vld [vmem:[%s0 + $0x78] sm:$0xff]
    %v32 = vld [vmem:[%s0 + $0x80] sm:$0xff]
    %v33 = vld [vmem:[%s0 + $0x88] sm:$0xff]
    %v34 = vld [vmem:[%s0 + $0x90] sm:$0xff]
    %v35 = vld [vmem:[%s0 + $0x98] sm:$0xff]
    %v36 = vld [vmem:[%s0 + $0xa0] sm:$0xff]
    %v37 = vld [vmem:[%s0 + $0xa8] sm:$0xff]
    %v38 = vld [vmem:[%s0 + $0xb0] sm:$0xff]
    %v39 = vld [vmem:[%s0 + $0xb8] sm:$0xff]
    %v40 = vld [vmem:[%s0 + $0xc0] sm:$0xff]
    %v41 = vld [vmem:[%s0 + $0xc8] sm:$0xff]
    %v42 = vld [vmem:[%s0 + $0xd0] sm:$0xff]
    %v43 = vld [vmem:[%s0 + $0xd8] sm:$0xff]
    %v44 = vld [vmem:[%s0 + $0xe0] sm:$0xff]
    %v45 = vld [vmem:[%s0 + $0xe8] sm:$0xff]
    %v46 = vld [vmem:[%s0 + $0xf0] sm:$0xff]
    %v47 = vld [vmem:[%s0 + $0xf8] sm:$0xff]
    %v48 = vld [vmem:[%s0 + $0x100] sm:$0xff]
    %v49 = vld [vmem:[%s0 + $0x108] sm:$0xff]
    %v50 = vld [vmem:[%s0 + $0x110] sm:$0xff]
    %v51 = vld [vmem:[%s0 + $0x118] sm:$0xff]
    %v52 = vld [vmem:[%s0 + $0x120] sm:$0xff]
    %v53 = vld [vmem:[%s0 + $0x128] sm:$0xff]
    %v54 = vld [vmem:[%s0 + $0x130] sm:$0xff]
    %v55 = vld [vmem:[%s0 + $0x138] sm:$0xff]
    %v56 = vld [vmem:[%s0 + $0x140] sm:$0xff]
    %v57 = vld [vmem:[%s0 + $0x148] sm:$0xff]
    %v58 = vld [vmem:[%s0 + $0x150] sm:$0xff]
    %v59 = vld [vmem:[%s0 + $0x158] sm:$0xff]
    %v60 = vld [vmem:[%s0 + $0x160] sm:$0xff]
    %v61 = vld [vmem:[%s0 + $0x168] sm:$0xff]
    %v62 = vld [vmem:[%s0 + $0x170] sm:$0xff]
    %v63 = vld [vmem:[%s0 + $0x178] sm:$0xff]
    %v64 = vld [vmem:[%s0 + $0x180] sm:$0xff]
    %v65 = vld [vmem:[%s0 + $0x188] sm:$0xff]
    %v66 = vld [vmem:[%s0 + $0x190] sm:$0xff]
    %v67 = vld [vmem:[%s0 + $0x198] sm:$0xff]
    %v68 = vld [vmem:[%s0 + $0x1a0] sm:$0xff]
    %v69 = vld [vmem:[%s0 + $0x1a8] sm:$0xff]
    %v70 = vld [vmem:[%s0 + $0x1b0] sm:$0xff]
    %v71 = vld [vmem:[%s0 + $0x1b8] sm:$0xff]
    %v72 = vld [vmem:[%s0 + $0x1c0] sm:$0xff]
    %v73 = vld [vmem:[%s0 + $0x1c8] sm:$0xff]
    %v74 = vld [vmem:[%s0 + $0x1d0] sm:$0xff]
    %v75 = vld [vmem:[%s0 + $0x1d8] sm:$0xff]
    %v76 = vld [vmem:[%s0 + $0x1e0] sm:$0xff]
    %v77 = vld [vmem:[%s0 + $0x1e8] sm:$0xff]
    %v78 = vld [vmem:[%s0 + $0x1f0] sm:$0xff]
    %v79 = vld [vmem:[%s0 + $0x1f8] sm:$0xff]
    %v80 = vld [vmem:[%s1] sm:$0xff]
    %v81 = vld [vmem:[%s1 + $0x8] sm:$0xff]
    %v82 = vld [vmem:[%s1 + $0x10] sm:$0xff]
    %v83 = vld [vmem:[%s1 + $0x18] sm:$0xff]
    %v84 = vld [vmem:[%s1 + $0x20] sm:$0xf]
    %vm85 = vcmask 293888
    %v87 = vsel %vm85, %v16, 0
    %v90 = vsel %vm85, %v17, 0
    %v93 = vsel %vm85, %v18, 0
    %v96 = vsel %vm85, %v19, 0
    %v99 = vsel %vm85, %v20, 0
    %v102 = vsel %vm85, %v21, 0
    %v105 = vsel %vm85, %v22, 0
    %v108 = vsel %vm85, %v23, 0
    %v111 = vsel %vm85, %v24, 0
    %v114 = vsel %vm85, %v25, 0
    %v117 = vsel %vm85, %v26, 0
    %v120 = vsel %vm85, %v27, 0
    %v123 = vsel %vm85, %v28, 0
    %v126 = vsel %vm85, %v29, 0
    %v129 = vsel %vm85, %v30, 0
    %v132 = vsel %vm85, %v31, 0
    %v135 = vsel %vm85, %v32, 0
    %v138 = vsel %vm85, %v33, 0
    %v141 = vsel %vm85, %v34, 0
    %v144 = vsel %vm85, %v35, 0
    %v147 = vsel %vm85, %v36, 0
    %v150 = vsel %vm85, %v37, 0
    %v153 = vsel %vm85, %v38, 0
    %v156 = vsel %vm85, %v39, 0
    %v159 = vsel %vm85, %v40, 0
    %v162 = vsel %vm85, %v41, 0
    %v165 = vsel %vm85, %v42, 0
    %v168 = vsel %vm85, %v43, 0
    %v171 = vsel %vm85, %v44, 0
    %v174 = vsel %vm85, %v45, 0
    %v177 = vsel %vm85, %v46, 0
    %v180 = vsel %vm85, %v47, 0
    %v183 = vsel %vm85, %v48, 0
    %v186 = vsel %vm85, %v49, 0
    %v189 = vsel %vm85, %v50, 0
    %v192 = vsel %vm85, %v51, 0
    %v195 = vsel %vm85, %v52, 0
    %v198 = vsel %vm85, %v53, 0
    %v201 = vsel %vm85, %v54, 0
    %v204 = vsel %vm85, %v55, 0
    %v207 = vsel %vm85, %v56, 0
    %v210 = vsel %vm85, %v57, 0
    %v213 = vsel %vm85, %v58, 0
    %v216 = vsel %vm85, %v59, 0
    %v219 = vsel %vm85, %v60, 0
    %v222 = vsel %vm85, %v61, 0
    %v225 = vsel %vm85, %v62, 0
    %v228 = vsel %vm85, %v63, 0
    %v231 = vsel %vm85, %v64, 0
    %v234 = vsel %vm85, %v65, 0
    %v237 = vsel %vm85, %v66, 0
    %v240 = vsel %vm85, %v67, 0
    %v243 = vsel %vm85, %v68, 0
    %v246 = vsel %vm85, %v69, 0
    %v249 = vsel %vm85, %v70, 0
    %v252 = vsel %vm85, %v71, 0
    %v255 = vsel %vm85, %v72, 0
    %v258 = vsel %vm85, %v73, 0
    %v261 = vsel %vm85, %v74, 0
    %v264 = vsel %vm85, %v75, 0
    %v267 = vsel %vm85, %v76, 0
    %v270 = vsel %vm85, %v77, 0
    %v273 = vsel %vm85, %v78, 0
    %v276 = vsel %vm85, %v79, 0
    %vm278 = vcmask 1043456
    %v280 = vsel %vm278, %v84, 0
    %282 = vmatprep.subr.mxu0 0.0
    %283 = vmatpush1.msra.mxu0 0.0
    %284 = vmatprep.subr.mxu0 0.0
    %285 = vmatpush1.msra.mxu0 0.0
    %286 = vmatprep.subr.mxu0 0.0
    %287 = vmatpush1.msra.mxu0 0.0
    %288 = vmatprep.subr.mxu0 0.0
    %289 = vmatpush1.msra.mxu0 0.0
    %290 = vmatprep.subr.mxu0 0.0
    %291 = vmatpush1.msra.mxu0 0.0
    %292 = vmatprep.subr.mxu0 0.0
    %293 = vmatpush1.msra.mxu0 0.0
    %294 = vmatprep.subr.mxu0 0.0
    %295 = vmatpush1.msra.mxu0 0.0
    %296 = vmatprep.subr.mxu0 0.0
    %297 = vmatpush1.msra.mxu0 0.0
    %298 = vmatprep.subr.mxu0 0.0
    %299 = vmatpush1.msra.mxu0 0.0
    %300 = vmatprep.subr.mxu0 0.0
    %301 = vmatpush1.msra.mxu0 0.0
    %302 = vmatprep.subr.mxu0 0.0
    %303 = vmatpush1.msra.mxu0 0.0
    %304 = vmatprep.subr.mxu0 0.0
    %305 = vmatpush1.msra.mxu0 %v280
    %306 = vmatprep.subr.mxu0 0.0
    %307 = vmatpush1.msra.mxu0 %v83
    %308 = vmatprep.subr.mxu0 0.0
    %309 = vmatpush1.msra.mxu0 %v82
    %310 = vmatprep.subr.mxu0 0.0
    %311 = vmatpush1.msra.mxu0 %v81
    %312 = vmatprep.subr.mxu0 0.0
    %313 = vmatpush1.msra.mxu0 %v80
    %314 = vmatprep.subr.mxu0 0.0
    %315 = vmatpush2.msra.mxu0 0.0
    %316 = vmatprep.subr.mxu0 0.0
    %317 = vmatpush2.msra.mxu0 0.0
    %318 = vmatprep.subr.mxu0 0.0
    %319 = vmatpush2.msra.mxu0 0.0
    %320 = vmatprep.subr.mxu0 0.0
    %321 = vmatpush2.msra.mxu0 0.0
    %322 = vmatprep.subr.mxu0 0.0
    %323 = vmatpush2.msra.mxu0 0.0
    %324 = vmatprep.subr.mxu0 0.0
    %325 = vmatpush2.msra.mxu0 0.0
    %326 = vmatprep.subr.mxu0 0.0
    %327 = vmatpush2.msra.mxu0 0.0
    %328 = vmatprep.subr.mxu0 0.0
    %329 = vmatpush2.msra.mxu0 0.0
    %330 = vmatprep.subr.mxu0 0.0
    %331 = vmatpush2.msra.mxu0 0.0
    %332 = vmatprep.subr.mxu0 0.0
    %333 = vmatpush2.msra.mxu0 0.0
    %334 = vmatprep.subr.mxu0 0.0
    %335 = vmatpush2.msra.mxu0 0.0
    %336 = vmatprep.subr.mxu0 0.0
    %337 = vmatpush2.msra.mxu0 0.0
    %338 = vmatprep.subr.mxu0 0.0
    %339 = vmatpush2.msra.mxu0 0.0
    %340 = vmatprep.subr.mxu0 0.0
    %341 = vmatpush2.msra.mxu0 0.0
    %342 = vmatprep.subr.mxu0 0.0
    %343 = vmatpush2.msra.mxu0 0.0
    %344 = vmatprep.subr.mxu0 0.0
    %345 = vmatpush2.msra.mxu0 0.0
    %346 = vmatprep.mubr.f32.mxu0 0.0
    %347 = vmatmul.mubr.f32.gmra.mxu0 %v87
    %v348 = vpop.f32.mrf.mxu0
    %v349 = vadd.f32 0.0, %v348
    %v350 = vpop.f32.mrf.mxu0
    %351 = vmatprep.mubr.f32.mxu0 0.0
    %352 = vmatmul.mubr.f32.gmra.mxu0 %v90
    %v353 = vpop.f32.mrf.mxu0
    %v354 = vadd.f32 0.0, %v353
    %v355 = vpop.f32.mrf.mxu0
    %356 = vmatprep.mubr.f32.mxu0 0.0
    %357 = vmatmul.mubr.f32.gmra.mxu0 %v93
    %v358 = vpop.f32.mrf.mxu0
    %v359 = vadd.f32 0.0, %v358
    %v360 = vpop.f32.mrf.mxu0
    %361 = vmatprep.mubr.f32.mxu0 0.0
    %362 = vmatmul.mubr.f32.gmra.mxu0 %v96
    %v363 = vpop.f32.mrf.mxu0
    %v364 = vadd.f32 0.0, %v363
    %v365 = vpop.f32.mrf.mxu0
    %366 = vmatprep.mubr.f32.mxu0 0.0
    %367 = vmatmul.mubr.f32.gmra.mxu0 %v99
    %v368 = vpop.f32.mrf.mxu0
    %v369 = vadd.f32 0.0, %v368
    %v370 = vpop.f32.mrf.mxu0
    %371 = vmatprep.mubr.f32.mxu0 0.0
    %372 = vmatmul.mubr.f32.gmra.mxu0 %v102
    %v373 = vpop.f32.mrf.mxu0
    %v374 = vadd.f32 0.0, %v373
    %v375 = vpop.f32.mrf.mxu0
    %376 = vmatprep.mubr.f32.mxu0 0.0
    %377 = vmatmul.mubr.f32.gmra.mxu0 %v105
    %v378 = vpop.f32.mrf.mxu0
    %v379 = vadd.f32 0.0, %v378
    %v380 = vpop.f32.mrf.mxu0
    %381 = vmatprep.mubr.f32.mxu0 0.0
    %382 = vmatmul.mubr.f32.gmra.mxu0 %v108
    %v383 = vpop.f32.mrf.mxu0
    %v384 = vadd.f32 0.0, %v383
    %v385 = vpop.f32.mrf.mxu0
    %386 = vmatprep.mubr.f32.mxu0 0.0
    %387 = vmatmul.mubr.f32.gmra.mxu0 %v111
    %v388 = vpop.f32.mrf.mxu0
    %v389 = vadd.f32 0.0, %v388
    %v390 = vpop.f32.mrf.mxu0
    %391 = vmatprep.mubr.f32.mxu0 0.0
    %392 = vmatmul.mubr.f32.gmra.mxu0 %v114
    %v393 = vpop.f32.mrf.mxu0
    %v394 = vadd.f32 0.0, %v393
    %v395 = vpop.f32.mrf.mxu0
    %396 = vmatprep.mubr.f32.mxu0 0.0
    %397 = vmatmul.mubr.f32.gmra.mxu0 %v117
    %v398 = vpop.f32.mrf.mxu0
    %v399 = vadd.f32 0.0, %v398
    %v400 = vpop.f32.mrf.mxu0
    %401 = vmatprep.mubr.f32.mxu0 0.0
    %402 = vmatmul.mubr.f32.gmra.mxu0 %v120
    %v403 = vpop.f32.mrf.mxu0
    %v404 = vadd.f32 0.0, %v403
    %v405 = vpop.f32.mrf.mxu0
    %406 = vmatprep.mubr.f32.mxu0 0.0
    %407 = vmatmul.mubr.f32.gmra.mxu0 %v123
    %v408 = vpop.f32.mrf.mxu0
    %v409 = vadd.f32 0.0, %v408
    %v410 = vpop.f32.mrf.mxu0
    %411 = vmatprep.mubr.f32.mxu0 0.0
    %412 = vmatmul.mubr.f32.gmra.mxu0 %v126
    %v413 = vpop.f32.mrf.mxu0
    %v414 = vadd.f32 0.0, %v413
    %v415 = vpop.f32.mrf.mxu0
    %416 = vmatprep.mubr.f32.mxu0 0.0
    %417 = vmatmul.mubr.f32.gmra.mxu0 %v129
    %v418 = vpop.f32.mrf.mxu0
    %v419 = vadd.f32 0.0, %v418
    %v420 = vpop.f32.mrf.mxu0
    %421 = vmatprep.mubr.f32.mxu0 0.0
    %422 = vmatmul.mubr.f32.gmra.mxu0 %v132
    %v423 = vpop.f32.mrf.mxu0
    %v424 = vadd.f32 0.0, %v423
    %v425 = vpop.f32.mrf.mxu0
    %426 = vmatprep.mubr.f32.mxu0 0.0
    %427 = vmatmul.mubr.f32.gmra.mxu0 %v135
    %v428 = vpop.f32.mrf.mxu0
    %v429 = vadd.f32 0.0, %v428
    %v430 = vpop.f32.mrf.mxu0
    %431 = vmatprep.mubr.f32.mxu0 0.0
    %432 = vmatmul.mubr.f32.gmra.mxu0 %v138
    %v433 = vpop.f32.mrf.mxu0
    %v434 = vadd.f32 0.0, %v433
    %v435 = vpop.f32.mrf.mxu0
    %436 = vmatprep.mubr.f32.mxu0 0.0
    %437 = vmatmul.mubr.f32.gmra.mxu0 %v141
    %v438 = vpop.f32.mrf.mxu0
    %v439 = vadd.f32 0.0, %v438
    %v440 = vpop.f32.mrf.mxu0
    %441 = vmatprep.mubr.f32.mxu0 0.0
    %442 = vmatmul.mubr.f32.gmra.mxu0 %v144
    %v443 = vpop.f32.mrf.mxu0
    %v444 = vadd.f32 0.0, %v443
    %v445 = vpop.f32.mrf.mxu0
    %446 = vmatprep.mubr.f32.mxu0 0.0
    %447 = vmatmul.mubr.f32.gmra.mxu0 %v147
    %v448 = vpop.f32.mrf.mxu0
    %v449 = vadd.f32 0.0, %v448
    %v450 = vpop.f32.mrf.mxu0
    %451 = vmatprep.mubr.f32.mxu0 0.0
    %452 = vmatmul.mubr.f32.gmra.mxu0 %v150
    %v453 = vpop.f32.mrf.mxu0
    %v454 = vadd.f32 0.0, %v453
    %v455 = vpop.f32.mrf.mxu0
    %456 = vmatprep.mubr.f32.mxu0 0.0
    %457 = vmatmul.mubr.f32.gmra.mxu0 %v153
    %v458 = vpop.f32.mrf.mxu0
    %v459 = vadd.f32 0.0, %v458
    %v460 = vpop.f32.mrf.mxu0
    %461 = vmatprep.mubr.f32.mxu0 0.0
    %462 = vmatmul.mubr.f32.gmra.mxu0 %v156
    %v463 = vpop.f32.mrf.mxu0
    %v464 = vadd.f32 0.0, %v463
    %v465 = vpop.f32.mrf.mxu0
    %466 = vmatprep.mubr.f32.mxu0 0.0
    %467 = vmatmul.mubr.f32.gmra.mxu0 %v159
    %v468 = vpop.f32.mrf.mxu0
    %v469 = vadd.f32 0.0, %v468
    %v470 = vpop.f32.mrf.mxu0
    %471 = vmatprep.mubr.f32.mxu0 0.0
    %472 = vmatmul.mubr.f32.gmra.mxu0 %v162
    %v473 = vpop.f32.mrf.mxu0
    %v474 = vadd.f32 0.0, %v473
    %v475 = vpop.f32.mrf.mxu0
    %476 = vmatprep.mubr.f32.mxu0 0.0
    %477 = vmatmul.mubr.f32.gmra.mxu0 %v165
    %v478 = vpop.f32.mrf.mxu0
    %v479 = vadd.f32 0.0, %v478
    %v480 = vpop.f32.mrf.mxu0
    %481 = vmatprep.mubr.f32.mxu0 0.0
    %482 = vmatmul.mubr.f32.gmra.mxu0 %v168
    %v483 = vpop.f32.mrf.mxu0
    %v484 = vadd.f32 0.0, %v483
    %v485 = vpop.f32.mrf.mxu0
    %486 = vmatprep.mubr.f32.mxu0 0.0
    %487 = vmatmul.mubr.f32.gmra.mxu0 %v171
    %v488 = vpop.f32.mrf.mxu0
    %v489 = vadd.f32 0.0, %v488
    %v490 = vpop.f32.mrf.mxu0
    %491 = vmatprep.mubr.f32.mxu0 0.0
    %492 = vmatmul.mubr.f32.gmra.mxu0 %v174
    %v493 = vpop.f32.mrf.mxu0
    %v494 = vadd.f32 0.0, %v493
    %v495 = vpop.f32.mrf.mxu0
    %496 = vmatprep.mubr.f32.mxu0 0.0
    %497 = vmatmul.mubr.f32.gmra.mxu0 %v177
    %v498 = vpop.f32.mrf.mxu0
    %v499 = vadd.f32 0.0, %v498
    %v500 = vpop.f32.mrf.mxu0
    %501 = vmatprep.mubr.f32.mxu0 0.0
    %502 = vmatmul.mubr.f32.gmra.mxu0 %v180
    %v503 = vpop.f32.mrf.mxu0
    %v504 = vadd.f32 0.0, %v503
    %v505 = vpop.f32.mrf.mxu0
    %506 = vmatprep.mubr.f32.mxu0 0.0
    %507 = vmatmul.mubr.f32.gmra.mxu0 %v183
    %v508 = vpop.f32.mrf.mxu0
    %v509 = vadd.f32 0.0, %v508
    %v510 = vpop.f32.mrf.mxu0
    %511 = vmatprep.mubr.f32.mxu0 0.0
    %512 = vmatmul.mubr.f32.gmra.mxu0 %v186
    %v513 = vpop.f32.mrf.mxu0
    %v514 = vadd.f32 0.0, %v513
    %v515 = vpop.f32.mrf.mxu0
    %516 = vmatprep.mubr.f32.mxu0 0.0
    %517 = vmatmul.mubr.f32.gmra.mxu0 %v189
    %v518 = vpop.f32.mrf.mxu0
    %v519 = vadd.f32 0.0, %v518
    %v520 = vpop.f32.mrf.mxu0
    %521 = vmatprep.mubr.f32.mxu0 0.0
    %522 = vmatmul.mubr.f32.gmra.mxu0 %v192
    %v523 = vpop.f32.mrf.mxu0
    %v524 = vadd.f32 0.0, %v523
    %v525 = vpop.f32.mrf.mxu0
    %526 = vmatprep.mubr.f32.mxu0 0.0
    %527 = vmatmul.mubr.f32.gmra.mxu0 %v195
    %v528 = vpop.f32.mrf.mxu0
    %v529 = vadd.f32 0.0, %v528
    %v530 = vpop.f32.mrf.mxu0
    %531 = vmatprep.mubr.f32.mxu0 0.0
    %532 = vmatmul.mubr.f32.gmra.mxu0 %v198
    %v533 = vpop.f32.mrf.mxu0
    %v534 = vadd.f32 0.0, %v533
    %v535 = vpop.f32.mrf.mxu0
    %536 = vmatprep.mubr.f32.mxu0 0.0
    %537 = vmatmul.mubr.f32.gmra.mxu0 %v201
    %v538 = vpop.f32.mrf.mxu0
    %v539 = vadd.f32 0.0, %v538
    %v540 = vpop.f32.mrf.mxu0
    %541 = vmatprep.mubr.f32.mxu0 0.0
    %542 = vmatmul.mubr.f32.gmra.mxu0 %v204
    %v543 = vpop.f32.mrf.mxu0
    %v544 = vadd.f32 0.0, %v543
    %v545 = vpop.f32.mrf.mxu0
    %546 = vmatprep.mubr.f32.mxu0 0.0
    %547 = vmatmul.mubr.f32.gmra.mxu0 %v207
    %v548 = vpop.f32.mrf.mxu0
    %v549 = vadd.f32 0.0, %v548
    %v550 = vpop.f32.mrf.mxu0
    %551 = vmatprep.mubr.f32.mxu0 0.0
    %552 = vmatmul.mubr.f32.gmra.mxu0 %v210
    %v553 = vpop.f32.mrf.mxu0
    %v554 = vadd.f32 0.0, %v553
    %v555 = vpop.f32.mrf.mxu0
    %556 = vmatprep.mubr.f32.mxu0 0.0
    %557 = vmatmul.mubr.f32.gmra.mxu0 %v213
    %v558 = vpop.f32.mrf.mxu0
    %v559 = vadd.f32 0.0, %v558
    %v560 = vpop.f32.mrf.mxu0
    %561 = vmatprep.mubr.f32.mxu0 0.0
    %562 = vmatmul.mubr.f32.gmra.mxu0 %v216
    %v563 = vpop.f32.mrf.mxu0
    %v564 = vadd.f32 0.0, %v563
    %v565 = vpop.f32.mrf.mxu0
    %566 = vmatprep.mubr.f32.mxu0 0.0
    %567 = vmatmul.mubr.f32.gmra.mxu0 %v219
    %v568 = vpop.f32.mrf.mxu0
    %v569 = vadd.f32 0.0, %v568
    %v570 = vpop.f32.mrf.mxu0
    %571 = vmatprep.mubr.f32.mxu0 0.0
    %572 = vmatmul.mubr.f32.gmra.mxu0 %v222
    %v573 = vpop.f32.mrf.mxu0
    %v574 = vadd.f32 0.0, %v573
    %v575 = vpop.f32.mrf.mxu0
    %576 = vmatprep.mubr.f32.mxu0 0.0
    %577 = vmatmul.mubr.f32.gmra.mxu0 %v225
    %v578 = vpop.f32.mrf.mxu0
    %v579 = vadd.f32 0.0, %v578
    %v580 = vpop.f32.mrf.mxu0
    %581 = vmatprep.mubr.f32.mxu0 0.0
    %582 = vmatmul.mubr.f32.gmra.mxu0 %v228
    %v583 = vpop.f32.mrf.mxu0
    %v584 = vadd.f32 0.0, %v583
    %v585 = vpop.f32.mrf.mxu0
    %586 = vmatprep.mubr.f32.mxu0 0.0
    %587 = vmatmul.mubr.f32.gmra.mxu0 %v231
    %v588 = vpop.f32.mrf.mxu0
    %v589 = vadd.f32 0.0, %v588
    %v590 = vpop.f32.mrf.mxu0
    %591 = vmatprep.mubr.f32.mxu0 0.0
    %592 = vmatmul.mubr.f32.gmra.mxu0 %v234
    %v593 = vpop.f32.mrf.mxu0
    %v594 = vadd.f32 0.0, %v593
    %v595 = vpop.f32.mrf.mxu0
    %596 = vmatprep.mubr.f32.mxu0 0.0
    %597 = vmatmul.mubr.f32.gmra.mxu0 %v237
    %v598 = vpop.f32.mrf.mxu0
    %v599 = vadd.f32 0.0, %v598
    %v600 = vpop.f32.mrf.mxu0
    %601 = vmatprep.mubr.f32.mxu0 0.0
    %602 = vmatmul.mubr.f32.gmra.mxu0 %v240
    %v603 = vpop.f32.mrf.mxu0
    %v604 = vadd.f32 0.0, %v603
    %v605 = vpop.f32.mrf.mxu0
    %606 = vmatprep.mubr.f32.mxu0 0.0
    %607 = vmatmul.mubr.f32.gmra.mxu0 %v243
    %v608 = vpop.f32.mrf.mxu0
    %v609 = vadd.f32 0.0, %v608
    %v610 = vpop.f32.mrf.mxu0
    %611 = vmatprep.mubr.f32.mxu0 0.0
    %612 = vmatmul.mubr.f32.gmra.mxu0 %v246
    %v613 = vpop.f32.mrf.mxu0
    %v614 = vadd.f32 0.0, %v613
    %v615 = vpop.f32.mrf.mxu0
    %616 = vmatprep.mubr.f32.mxu0 0.0
    %617 = vmatmul.mubr.f32.gmra.mxu0 %v249
    %v618 = vpop.f32.mrf.mxu0
    %v619 = vadd.f32 0.0, %v618
    %v620 = vpop.f32.mrf.mxu0
    %621 = vmatprep.mubr.f32.mxu0 0.0
    %622 = vmatmul.mubr.f32.gmra.mxu0 %v252
    %v623 = vpop.f32.mrf.mxu0
    %v624 = vadd.f32 0.0, %v623
    %v625 = vpop.f32.mrf.mxu0
    %626 = vmatprep.mubr.f32.mxu0 0.0
    %627 = vmatmul.mubr.f32.gmra.mxu0 %v255
    %v628 = vpop.f32.mrf.mxu0
    %v629 = vadd.f32 0.0, %v628
    %v630 = vpop.f32.mrf.mxu0
    %631 = vmatprep.mubr.f32.mxu0 0.0
    %632 = vmatmul.mubr.f32.gmra.mxu0 %v258
    %v633 = vpop.f32.mrf.mxu0
    %v634 = vadd.f32 0.0, %v633
    %v635 = vpop.f32.mrf.mxu0
    %636 = vmatprep.mubr.f32.mxu0 0.0
    %637 = vmatmul.mubr.f32.gmra.mxu0 %v261
    %v638 = vpop.f32.mrf.mxu0
    %v639 = vadd.f32 0.0, %v638
    %v640 = vpop.f32.mrf.mxu0
    %641 = vmatprep.mubr.f32.mxu0 0.0
    %642 = vmatmul.mubr.f32.gmra.mxu0 %v264
    %v643 = vpop.f32.mrf.mxu0
    %v644 = vadd.f32 0.0, %v643
    %v645 = vpop.f32.mrf.mxu0
    %646 = vmatprep.mubr.f32.mxu0 0.0
    %647 = vmatmul.mubr.f32.gmra.mxu0 %v267
    %v648 = vpop.f32.mrf.mxu0
    %v649 = vadd.f32 0.0, %v648
    %v650 = vpop.f32.mrf.mxu0
    %651 = vmatprep.mubr.f32.mxu0 0.0
    %652 = vmatmul.mubr.f32.gmra.mxu0 %v270
    %v653 = vpop.f32.mrf.mxu0
    %v654 = vadd.f32 0.0, %v653
    %v655 = vpop.f32.mrf.mxu0
    %656 = vmatprep.mubr.f32.mxu0 0.0
    %657 = vmatmul.mubr.f32.gmra.mxu0 %v273
    %v658 = vpop.f32.mrf.mxu0
    %v659 = vadd.f32 0.0, %v658
    %v660 = vpop.f32.mrf.mxu0
    %661 = vmatprep.mubr.f32.mxu0 0.0
    %662 = vmatmul.mubr.f32.gmra.mxu0 %v276
    %v663 = vpop.f32.mrf.mxu0
    %v664 = vadd.f32 0.0, %v663
    %v665 = vpop.f32.mrf.mxu0
    %666 = vdwg.mxu0
    %667 = vst [vmem:[#allocation2] sm:$0xff] %v349
    %668 = vst [vmem:[#allocation2 + $0x8] sm:$0xff] %v354
    %669 = vst [vmem:[#allocation2 + $0x10] sm:$0xff] %v359
    %670 = vst [vmem:[#allocation2 + $0x18] sm:$0xff] %v364
    %671 = vst [vmem:[#allocation2 + $0x20] sm:$0xff] %v369
    %672 = vst [vmem:[#allocation2 + $0x28] sm:$0xff] %v374
    %673 = vst [vmem:[#allocation2 + $0x30] sm:$0xff] %v379
    %674 = vst [vmem:[#allocation2 + $0x38] sm:$0xff] %v384
    %675 = vst [vmem:[#allocation2 + $0x40] sm:$0xff] %v389
    %676 = vst [vmem:[#allocation2 + $0x48] sm:$0xff] %v394
    %677 = vst [vmem:[#allocation2 + $0x50] sm:$0xff] %v399
    %678 = vst [vmem:[#allocation2 + $0x58] sm:$0xff] %v404
    %679 = vst [vmem:[#allocation2 + $0x60] sm:$0xff] %v409
    %680 = vst [vmem:[#allocation2 + $0x68] sm:$0xff] %v414
    %681 = vst [vmem:[#allocation2 + $0x70] sm:$0xff] %v419
    %682 = vst [vmem:[#allocation2 + $0x78] sm:$0xff] %v424
    %683 = vst [vmem:[#allocation2 + $0x80] sm:$0xff] %v429
    %684 = vst [vmem:[#allocation2 + $0x88] sm:$0xff] %v434
    %685 = vst [vmem:[#allocation2 + $0x90] sm:$0xff] %v439
    %686 = vst [vmem:[#allocation2 + $0x98] sm:$0xff] %v444
    %687 = vst [vmem:[#allocation2 + $0xa0] sm:$0xff] %v449
    %688 = vst [vmem:[#allocation2 + $0xa8] sm:$0xff] %v454
    %689 = vst [vmem:[#allocation2 + $0xb0] sm:$0xff] %v459
    %690 = vst [vmem:[#allocation2 + $0xb8] sm:$0xff] %v464
    %691 = vst [vmem:[#allocation2 + $0xc0] sm:$0xff] %v469
    %692 = vst [vmem:[#allocation2 + $0xc8] sm:$0xff] %v474
    %693 = vst [vmem:[#allocation2 + $0xd0] sm:$0xff] %v479
    %694 = vst [vmem:[#allocation2 + $0xd8] sm:$0xff] %v484
    %695 = vst [vmem:[#allocation2 + $0xe0] sm:$0xff] %v489
    %696 = vst [vmem:[#allocation2 + $0xe8] sm:$0xff] %v494
    %697 = vst [vmem:[#allocation2 + $0xf0] sm:$0xff] %v499
    %698 = vst [vmem:[#allocation2 + $0xf8] sm:$0xff] %v504
    %699 = vst [vmem:[#allocation2 + $0x100] sm:$0xff] %v509
    %700 = vst [vmem:[#allocation2 + $0x108] sm:$0xff] %v514
    %701 = vst [vmem:[#allocation2 + $0x110] sm:$0xff] %v519
    %702 = vst [vmem:[#allocation2 + $0x118] sm:$0xff] %v524
    %703 = vst [vmem:[#allocation2 + $0x120] sm:$0xff] %v529
    %704 = vst [vmem:[#allocation2 + $0x128] sm:$0xff] %v534
    %705 = vst [vmem:[#allocation2 + $0x130] sm:$0xff] %v539
    %706 = vst [vmem:[#allocation2 + $0x138] sm:$0xff] %v544
    %707 = vst [vmem:[#allocation2 + $0x140] sm:$0xff] %v549
    %708 = vst [vmem:[#allocation2 + $0x148] sm:$0xff] %v554
    %709 = vst [vmem:[#allocation2 + $0x150] sm:$0xff] %v559
    %710 = vst [vmem:[#allocation2 + $0x158] sm:$0xff] %v564
    %711 = vst [vmem:[#allocation2 + $0x160] sm:$0xff] %v569
    %712 = vst [vmem:[#allocation2 + $0x168] sm:$0xff] %v574
    %713 = vst [vmem:[#allocation2 + $0x170] sm:$0xff] %v579
    %714 = vst [vmem:[#allocation2 + $0x178] sm:$0xff] %v584
    %715 = vst [vmem:[#allocation2 + $0x180] sm:$0xff] %v589
    %716 = vst [vmem:[#allocation2 + $0x188] sm:$0xff] %v594
    %717 = vst [vmem:[#allocation2 + $0x190] sm:$0xff] %v599
    %718 = vst [vmem:[#allocation2 + $0x198] sm:$0xff] %v604
    %719 = vst [vmem:[#allocation2 + $0x1a0] sm:$0xff] %v609
    %720 = vst [vmem:[#allocation2 + $0x1a8] sm:$0xff] %v614
    %721 = vst [vmem:[#allocation2 + $0x1b0] sm:$0xff] %v619
    %722 = vst [vmem:[#allocation2 + $0x1b8] sm:$0xff] %v624
    %723 = vst [vmem:[#allocation2 + $0x1c0] sm:$0xff] %v629
    %724 = vst [vmem:[#allocation2 + $0x1c8] sm:$0xff] %v634
    %725 = vst [vmem:[#allocation2 + $0x1d0] sm:$0xff] %v639
    %726 = vst [vmem:[#allocation2 + $0x1d8] sm:$0xff] %v644
    %727 = vst [vmem:[#allocation2 + $0x1e0] sm:$0xff] %v649
    %728 = vst [vmem:[#allocation2 + $0x1e8] sm:$0xff] %v654
    %729 = vst [vmem:[#allocation2 + $0x1f0] sm:$0xff] %v659
    %730 = vst [vmem:[#allocation2 + $0x1f8] sm:$0xff] %v664
    %s731 = smul.u32 0, 512
    %v732 = vlaneseq
    %v733 = vshrl.u32 %v732, 7
    %v734 = vadd.s32 %v733, 8
    %v735 = vadd.s32 %v733, 16
    %v736 = vadd.s32 %v733, 24
    %v737 = vadd.s32 %v733, 32
    %v738 = vadd.s32 %v733, 40
    %v739 = vadd.s32 %v733, 48
    %v740 = vadd.s32 %v733, 56
    %v741 = vadd.s32 %v733, 64
    %v742 = vadd.s32 %v733, 72
    %v743 = vadd.s32 %v733, 80
    %v744 = vadd.s32 %v733, 88
    %v745 = vadd.s32 %v733, 96
    %v746 = vadd.s32 %v733, 104
    %v747 = vadd.s32 %v733, 112
    %v748 = vadd.s32 %v733, 120
    %v749 = vadd.s32 %v733, 128
    %v750 = vadd.s32 %v733, 136
    %v751 = vadd.s32 %v733, 144
    %v752 = vadd.s32 %v733, 152
    %v753 = vadd.s32 %v733, 160
    %v754 = vadd.s32 %v733, 168
    %v755 = vadd.s32 %v733, 176
    %v756 = vadd.s32 %v733, 184
    %v757 = vadd.s32 %v733, 192
    %v758 = vadd.s32 %v733, 200
    %v759 = vadd.s32 %v733, 208
    %v760 = vadd.s32 %v733, 216
    %v761 = vadd.s32 %v733, 224
    %v762 = vadd.s32 %v733, 232
    %v763 = vadd.s32 %v733, 240
    %v764 = vadd.s32 %v733, 248
    %v765 = vadd.s32 %v733, 256
    %v766 = vadd.s32 %v733, 264
    %v767 = vadd.s32 %v733, 272
    %v768 = vadd.s32 %v733, 280
    %v769 = vadd.s32 %v733, 288
    %v770 = vadd.s32 %v733, 296
    %v771 = vadd.s32 %v733, 304
    %v772 = vadd.s32 %v733, 312
    %v773 = vadd.s32 %v733, 320
    %v774 = vadd.s32 %v733, 328
    %v775 = vadd.s32 %v733, 336
    %v776 = vadd.s32 %v733, 344
    %v777 = vadd.s32 %v733, 352
    %v778 = vadd.s32 %v733, 360
    %v779 = vadd.s32 %v733, 368
    %v780 = vadd.s32 %v733, 376
    %v781 = vadd.s32 %v733, 384
    %v782 = vadd.s32 %v733, 392
    %v783 = vadd.s32 %v733, 400
    %v784 = vadd.s32 %v733, 408
    %v785 = vadd.s32 %v733, 416
    %v786 = vadd.s32 %v733, 424
    %v787 = vadd.s32 %v733, 432
    %v788 = vadd.s32 %v733, 440
    %v789 = vadd.s32 %v733, 448
    %v790 = vadd.s32 %v733, 456
    %v791 = vadd.s32 %v733, 464
    %v792 = vadd.s32 %v733, 472
    %v793 = vadd.s32 %v733, 480
    %v794 = vadd.s32 %v733, 488
    %v795 = vadd.s32 %v733, 496
    %v796 = vadd.s32 %v733, 504
    %v797 = vstv %s731
    %v798 = vadd.s32 %v797, %v733
    %v799 = vadd.s32 %v797, %v734
    %v800 = vadd.s32 %v797, %v735
    %v801 = vadd.s32 %v797, %v736
    %v802 = vadd.s32 %v797, %v737
    %v803 = vadd.s32 %v797, %v738
    %v804 = vadd.s32 %v797, %v739
    %v805 = vadd.s32 %v797, %v740
    %v806 = vadd.s32 %v797, %v741
    %v807 = vadd.s32 %v797, %v742
    %v808 = vadd.s32 %v797, %v743
    %v809 = vadd.s32 %v797, %v744
    %v810 = vadd.s32 %v797, %v745
    %v811 = vadd.s32 %v797, %v746
    %v812 = vadd.s32 %v797, %v747
    %v813 = vadd.s32 %v797, %v748
    %v814 = vadd.s32 %v797, %v749
    %v815 = vadd.s32 %v797, %v750
    %v816 = vadd.s32 %v797, %v751
    %v817 = vadd.s32 %v797, %v752
    %v818 = vadd.s32 %v797, %v753
    %v819 = vadd.s32 %v797, %v754
    %v820 = vadd.s32 %v797, %v755
    %v821 = vadd.s32 %v797, %v756
    %v822 = vadd.s32 %v797, %v757
    %v823 = vadd.s32 %v797, %v758
    %v824 = vadd.s32 %v797, %v759
    %v825 = vadd.s32 %v797, %v760
    %v826 = vadd.s32 %v797, %v761
    %v827 = vadd.s32 %v797, %v762
    %v828 = vadd.s32 %v797, %v763
    %v829 = vadd.s32 %v797, %v764
    %v830 = vadd.s32 %v797, %v765
    %v831 = vadd.s32 %v797, %v766
    %v832 = vadd.s32 %v797, %v767
    %v833 = vadd.s32 %v797, %v768
    %v834 = vadd.s32 %v797, %v769
    %v835 = vadd.s32 %v797, %v770
    %v836 = vadd.s32 %v797, %v771
    %v837 = vadd.s32 %v797, %v772
    %v838 = vadd.s32 %v797, %v773
    %v839 = vadd.s32 %v797, %v774
    %v840 = vadd.s32 %v797, %v775
    %v841 = vadd.s32 %v797, %v776
    %v842 = vadd.s32 %v797, %v777
    %v843 = vadd.s32 %v797, %v778
    %v844 = vadd.s32 %v797, %v779
    %v845 = vadd.s32 %v797, %v780
    %v846 = vadd.s32 %v797, %v781
    %v847 = vadd.s32 %v797, %v782
    %v848 = vadd.s32 %v797, %v783
    %v849 = vadd.s32 %v797, %v784
    %v850 = vadd.s32 %v797, %v785
    %v851 = vadd.s32 %v797, %v786
    %v852 = vadd.s32 %v797, %v787
    %v853 = vadd.s32 %v797, %v788
    %v854 = vadd.s32 %v797, %v789
    %v855 = vadd.s32 %v797, %v790
    %v856 = vadd.s32 %v797, %v791
    %v857 = vadd.s32 %v797, %v792
    %v858 = vadd.s32 %v797, %v793
    %v859 = vadd.s32 %v797, %v794
    %v860 = vadd.s32 %v797, %v795
    %v861 = vadd.s32 %v797, %v796
    %vm862 = vcmp.lt.s32.totalorder %v798, 512
    %vm863 = vcmp.lt.s32.totalorder %v799, 512
    %vm864 = vcmp.lt.s32.totalorder %v800, 512
    %vm865 = vcmp.lt.s32.totalorder %v801, 512
    %vm866 = vcmp.lt.s32.totalorder %v802, 512
    %vm867 = vcmp.lt.s32.totalorder %v803, 512
    %vm868 = vcmp.lt.s32.totalorder %v804, 512
    %vm869 = vcmp.lt.s32.totalorder %v805, 512
    %vm870 = vcmp.lt.s32.totalorder %v806, 512
    %vm871 = vcmp.lt.s32.totalorder %v807, 512
    %vm872 = vcmp.lt.s32.totalorder %v808, 512
    %vm873 = vcmp.lt.s32.totalorder %v809, 512
    %vm874 = vcmp.lt.s32.totalorder %v810, 512
    %vm875 = vcmp.lt.s32.totalorder %v811, 512
    %vm876 = vcmp.lt.s32.totalorder %v812, 512
    %vm877 = vcmp.lt.s32.totalorder %v813, 512
    %vm878 = vcmp.lt.s32.totalorder %v814, 512
    %vm879 = vcmp.lt.s32.totalorder %v815, 512
    %vm880 = vcmp.lt.s32.totalorder %v816, 512
    %vm881 = vcmp.lt.s32.totalorder %v817, 512
    %vm882 = vcmp.lt.s32.totalorder %v818, 512
    %vm883 = vcmp.lt.s32.totalorder %v819, 512
    %vm884 = vcmp.lt.s32.totalorder %v820, 512
    %vm885 = vcmp.lt.s32.totalorder %v821, 512
    %vm886 = vcmp.lt.s32.totalorder %v822, 512
    %vm887 = vcmp.lt.s32.totalorder %v823, 512
    %vm888 = vcmp.lt.s32.totalorder %v824, 512
    %vm889 = vcmp.lt.s32.totalorder %v825, 512
    %vm890 = vcmp.lt.s32.totalorder %v826, 512
    %vm891 = vcmp.lt.s32.totalorder %v827, 512
    %vm892 = vcmp.lt.s32.totalorder %v828, 512
    %vm893 = vcmp.lt.s32.totalorder %v829, 512
    %vm894 = vcmp.lt.s32.totalorder %v830, 512
    %vm895 = vcmp.lt.s32.totalorder %v831, 512
    %vm896 = vcmp.lt.s32.totalorder %v832, 512
    %vm897 = vcmp.lt.s32.totalorder %v833, 512
    %vm898 = vcmp.lt.s32.totalorder %v834, 512
    %vm899 = vcmp.lt.s32.totalorder %v835, 512
    %vm900 = vcmp.lt.s32.totalorder %v836, 512
    %vm901 = vcmp.lt.s32.totalorder %v837, 512
    %vm902 = vcmp.lt.s32.totalorder %v838, 512
    %vm903 = vcmp.lt.s32.totalorder %v839, 512
    %vm904 = vcmp.lt.s32.totalorder %v840, 512
    %vm905 = vcmp.lt.s32.totalorder %v841, 512
    %vm906 = vcmp.lt.s32.totalorder %v842, 512
    %vm907 = vcmp.lt.s32.totalorder %v843, 512
    %vm908 = vcmp.lt.s32.totalorder %v844, 512
    %vm909 = vcmp.lt.s32.totalorder %v845, 512
    %vm910 = vcmp.lt.s32.totalorder %v846, 512
    %vm911 = vcmp.lt.s32.totalorder %v847, 512
    %vm912 = vcmp.lt.s32.totalorder %v848, 512
    %vm913 = vcmp.lt.s32.totalorder %v849, 512
    %vm914 = vcmp.lt.s32.totalorder %v850, 512
    %vm915 = vcmp.lt.s32.totalorder %v851, 512
    %vm916 = vcmp.lt.s32.totalorder %v852, 512
    %vm917 = vcmp.lt.s32.totalorder %v853, 512
    %vm918 = vcmp.lt.s32.totalorder %v854, 512
    %vm919 = vcmp.lt.s32.totalorder %v855, 512
    %vm920 = vcmp.lt.s32.totalorder %v856, 512
    %vm921 = vcmp.lt.s32.totalorder %v857, 512
    %vm922 = vcmp.lt.s32.totalorder %v858, 512
    %vm923 = vcmp.lt.s32.totalorder %v859, 512
    %vm924 = vcmp.lt.s32.totalorder %v860, 512
    %vm925 = vcmp.lt.s32.totalorder %v861, 512
    %v926 = vsel %vm862, 1, 0
    %v927 = vsel %vm863, 1, 0
    %v928 = vsel %vm864, 1, 0
    %v929 = vsel %vm865, 1, 0
    %v930 = vsel %vm866, 1, 0
    %v931 = vsel %vm867, 1, 0
    %v932 = vsel %vm868, 1, 0
    %v933 = vsel %vm869, 1, 0
    %v934 = vsel %vm870, 1, 0
    %v935 = vsel %vm871, 1, 0
    %v936 = vsel %vm872, 1, 0
    %v937 = vsel %vm873, 1, 0
    %v938 = vsel %vm874, 1, 0
    %v939 = vsel %vm875, 1, 0
    %v940 = vsel %vm876, 1, 0
    %v941 = vsel %vm877, 1, 0
    %v942 = vsel %vm878, 1, 0
    %v943 = vsel %vm879, 1, 0
    %v944 = vsel %vm880, 1, 0
    %v945 = vsel %vm881, 1, 0
    %v946 = vsel %vm882, 1, 0
    %v947 = vsel %vm883, 1, 0
    %v948 = vsel %vm884, 1, 0
    %v949 = vsel %vm885, 1, 0
    %v950 = vsel %vm886, 1, 0
    %v951 = vsel %vm887, 1, 0
    %v952 = vsel %vm888, 1, 0
    %v953 = vsel %vm889, 1, 0
    %v954 = vsel %vm890, 1, 0
    %v955 = vsel %vm891, 1, 0
    %v956 = vsel %vm892, 1, 0
    %v957 = vsel %vm893, 1, 0
    %v958 = vsel %vm894, 1, 0
    %v959 = vsel %vm895, 1, 0
    %v960 = vsel %vm896, 1, 0
    %v961 = vsel %vm897, 1, 0
    %v962 = vsel %vm898, 1, 0
    %v963 = vsel %vm899, 1, 0
    %v964 = vsel %vm900, 1, 0
    %v965 = vsel %vm901, 1, 0
    %v966 = vsel %vm902, 1, 0
    %v967 = vsel %vm903, 1, 0
    %v968 = vsel %vm904, 1, 0
    %v969 = vsel %vm905, 1, 0
    %v970 = vsel %vm906, 1, 0
    %v971 = vsel %vm907, 1, 0
    %v972 = vsel %vm908, 1, 0
    %v973 = vsel %vm909, 1, 0
    %v974 = vsel %vm910, 1, 0
    %v975 = vsel %vm911, 1, 0
    %v976 = vsel %vm912, 1, 0
    %v977 = vsel %vm913, 1, 0
    %v978 = vsel %vm914, 1, 0
    %v979 = vsel %vm915, 1, 0
    %v980 = vsel %vm916, 1, 0
    %v981 = vsel %vm917, 1, 0
    %v982 = vsel %vm918, 1, 0
    %v983 = vsel %vm919, 1, 0
    %v984 = vsel %vm920, 1, 0
    %v985 = vsel %vm921, 1, 0
    %v986 = vsel %vm922, 1, 0
    %v987 = vsel %vm923, 1, 0
    %v988 = vsel %vm924, 1, 0
    %v989 = vsel %vm925, 1, 0
    %v990 = vcvt.s32.f32 %v926
    %v991 = vcvt.s32.f32 %v927
    %v992 = vcvt.s32.f32 %v928
    %v993 = vcvt.s32.f32 %v929
    %v994 = vcvt.s32.f32 %v930
    %v995 = vcvt.s32.f32 %v931
    %v996 = vcvt.s32.f32 %v932
    %v997 = vcvt.s32.f32 %v933
    %v998 = vcvt.s32.f32 %v934
    %v999 = vcvt.s32.f32 %v935
    %v1000 = vcvt.s32.f32 %v936
    %v1001 = vcvt.s32.f32 %v937
    %v1002 = vcvt.s32.f32 %v938
    %v1003 = vcvt.s32.f32 %v939
    %v1004 = vcvt.s32.f32 %v940
    %v1005 = vcvt.s32.f32 %v941
    %v1006 = vcvt.s32.f32 %v942
    %v1007 = vcvt.s32.f32 %v943
    %v1008 = vcvt.s32.f32 %v944
    %v1009 = vcvt.s32.f32 %v945
    %v1010 = vcvt.s32.f32 %v946
    %v1011 = vcvt.s32.f32 %v947
    %v1012 = vcvt.s32.f32 %v948
    %v1013 = vcvt.s32.f32 %v949
    %v1014 = vcvt.s32.f32 %v950
    %v1015 = vcvt.s32.f32 %v951
    %v1016 = vcvt.s32.f32 %v952
    %v1017 = vcvt.s32.f32 %v953
    %v1018 = vcvt.s32.f32 %v954
    %v1019 = vcvt.s32.f32 %v955
    %v1020 = vcvt.s32.f32 %v956
    %v1021 = vcvt.s32.f32 %v957
    %v1022 = vcvt.s32.f32 %v958
    %v1023 = vcvt.s32.f32 %v959
    %v1024 = vcvt.s32.f32 %v960
    %v1025 = vcvt.s32.f32 %v961
    %v1026 = vcvt.s32.f32 %v962
    %v1027 = vcvt.s32.f32 %v963
    %v1028 = vcvt.s32.f32 %v964
    %v1029 = vcvt.s32.f32 %v965
    %v1030 = vcvt.s32.f32 %v966
    %v1031 = vcvt.s32.f32 %v967
    %v1032 = vcvt.s32.f32 %v968
    %v1033 = vcvt.s32.f32 %v969
    %v1034 = vcvt.s32.f32 %v970
    %v1035 = vcvt.s32.f32 %v971
    %v1036 = vcvt.s32.f32 %v972
    %v1037 = vcvt.s32.f32 %v973
    %v1038 = vcvt.s32.f32 %v974
    %v1039 = vcvt.s32.f32 %v975
    %v1040 = vcvt.s32.f32 %v976
    %v1041 = vcvt.s32.f32 %v977
    %v1042 = vcvt.s32.f32 %v978
    %v1043 = vcvt.s32.f32 %v979
    %v1044 = vcvt.s32.f32 %v980
    %v1045 = vcvt.s32.f32 %v981
    %v1046 = vcvt.s32.f32 %v982
    %v1047 = vcvt.s32.f32 %v983
    %v1048 = vcvt.s32.f32 %v984
    %v1049 = vcvt.s32.f32 %v985
    %v1050 = vcvt.s32.f32 %v986
    %v1051 = vcvt.s32.f32 %v987
    %v1052 = vcvt.s32.f32 %v988
    %v1053 = vcvt.s32.f32 %v989
    %s1054 = ssub.s32 512, %s731
    %p1055 = scmp.lt.s32.totalorder %s1054, 512
    %s1056 = scalar_select %p1055, %s1054, 512
    %p1057 = scmp.gt.s32.totalorder %s1056, 1
    %s1058 = scalar_select %p1057, %s1056, 1
    %s1059 = scvt.s32.f32 %s1058
    %v1060 = vmul.f32 %v349, %v990
    %v1061 = vmul.f32 %v354, %v991
    %v1062 = vmul.f32 %v359, %v992
    %v1063 = vmul.f32 %v364, %v993
    %v1064 = vmul.f32 %v369, %v994
    %v1065 = vmul.f32 %v374, %v995
    %v1066 = vmul.f32 %v379, %v996
    %v1067 = vmul.f32 %v384, %v997
    %v1068 = vmul.f32 %v389, %v998
    %v1069 = vmul.f32 %v394, %v999
    %v1070 = vmul.f32 %v399, %v1000
    %v1071 = vmul.f32 %v404, %v1001
    %v1072 = vmul.f32 %v409, %v1002
    %v1073 = vmul.f32 %v414, %v1003
    %v1074 = vmul.f32 %v419, %v1004
    %v1075 = vmul.f32 %v424, %v1005
    %v1076 = vmul.f32 %v429, %v1006
    %v1077 = vmul.f32 %v434, %v1007
    %v1078 = vmul.f32 %v439, %v1008
    %v1079 = vmul.f32 %v444, %v1009
    %v1080 = vmul.f32 %v449, %v1010
    %v1081 = vmul.f32 %v454, %v1011
    %v1082 = vmul.f32 %v459, %v1012
    %v1083 = vmul.f32 %v464, %v1013
    %v1084 = vmul.f32 %v469, %v1014
    %v1085 = vmul.f32 %v474, %v1015
    %v1086 = vmul.f32 %v479, %v1016
    %v1087 = vmul.f32 %v484, %v1017
    %v1088 = vmul.f32 %v489, %v1018
    %v1089 = vmul.f32 %v494, %v1019
    %v1090 = vmul.f32 %v499, %v1020
    %v1091 = vmul.f32 %v504, %v1021
    %v1092 = vmul.f32 %v509, %v1022
    %v1093 = vmul.f32 %v514, %v1023
    %v1094 = vmul.f32 %v519, %v1024
    %v1095 = vmul.f32 %v524, %v1025
    %v1096 = vmul.f32 %v529, %v1026
    %v1097 = vmul.f32 %v534, %v1027
    %v1098 = vmul.f32 %v539, %v1028
    %v1099 = vmul.f32 %v544, %v1029
    %v1100 = vmul.f32 %v549, %v1030
    %v1101 = vmul.f32 %v554, %v1031
    %v1102 = vmul.f32 %v559, %v1032
    %v1103 = vmul.f32 %v564, %v1033
    %v1104 = vmul.f32 %v569, %v1034
    %v1105 = vmul.f32 %v574, %v1035
    %v1106 = vmul.f32 %v579, %v1036
    %v1107 = vmul.f32 %v584, %v1037
    %v1108 = vmul.f32 %v589, %v1038
    %v1109 = vmul.f32 %v594, %v1039
    %v1110 = vmul.f32 %v599, %v1040
    %v1111 = vmul.f32 %v604, %v1041
    %v1112 = vmul.f32 %v609, %v1042
    %v1113 = vmul.f32 %v614, %v1043
    %v1114 = vmul.f32 %v619, %v1044
    %v1115 = vmul.f32 %v624, %v1045
    %v1116 = vmul.f32 %v629, %v1046
    %v1117 = vmul.f32 %v634, %v1047
    %v1118 = vmul.f32 %v639, %v1048
    %v1119 = vmul.f32 %v644, %v1049
    %v1120 = vmul.f32 %v649, %v1050
    %v1121 = vmul.f32 %v654, %v1051
    %v1122 = vmul.f32 %v659, %v1052
    %v1123 = vmul.f32 %v664, %v1053
    %v1124 = vadd.f32 %v1060, %v1061
    %v1125 = vadd.f32 %v1124, %v1062
    %v1126 = vadd.f32 %v1125, %v1063
    %v1127 = vadd.f32 %v1126, %v1064
    %v1128 = vadd.f32 %v1127, %v1065
    %v1129 = vadd.f32 %v1128, %v1066
    %v1130 = vadd.f32 %v1129, %v1067
    %v1131 = vadd.f32 %v1130, %v1068
    %v1132 = vadd.f32 %v1131, %v1069
    %v1133 = vadd.f32 %v1132, %v1070
    %v1134 = vadd.f32 %v1133, %v1071
    %v1135 = vadd.f32 %v1134, %v1072
    %v1136 = vadd.f32 %v1135, %v1073
    %v1137 = vadd.f32 %v1136, %v1074
    %v1138 = vadd.f32 %v1137, %v1075
    %v1139 = vadd.f32 %v1138, %v1076
    %v1140 = vadd.f32 %v1139, %v1077
    %v1141 = vadd.f32 %v1140, %v1078
    %v1142 = vadd.f32 %v1141, %v1079
    %v1143 = vadd.f32 %v1142, %v1080
    %v1144 = vadd.f32 %v1143, %v1081
    %v1145 = vadd.f32 %v1144, %v1082
    %v1146 = vadd.f32 %v1145, %v1083
    %v1147 = vadd.f32 %v1146, %v1084
    %v1148 = vadd.f32 %v1147, %v1085
    %v1149 = vadd.f32 %v1148, %v1086
    %v1150 = vadd.f32 %v1149, %v1087
    %v1151 = vadd.f32 %v1150, %v1088
    %v1152 = vadd.f32 %v1151, %v1089
    %v1153 = vadd.f32 %v1152, %v1090
    %v1154 = vadd.f32 %v1153, %v1091
    %v1155 = vadd.f32 %v1154, %v1092
    %v1156 = vadd.f32 %v1155, %v1093
    %v1157 = vadd.f32 %v1156, %v1094
    %v1158 = vadd.f32 %v1157, %v1095
    %v1159 = vadd.f32 %v1158, %v1096
    %v1160 = vadd.f32 %v1159, %v1097
    %v1161 = vadd.f32 %v1160, %v1098
    %v1162 = vadd.f32 %v1161, %v1099
    %v1163 = vadd.f32 %v1162, %v1100
    %v1164 = vadd.f32 %v1163, %v1101
    %v1165 = vadd.f32 %v1164, %v1102
    %v1166 = vadd.f32 %v1165, %v1103
    %v1167 = vadd.f32 %v1166, %v1104
    %v1168 = vadd.f32 %v1167, %v1105
    %v1169 = vadd.f32 %v1168, %v1106
    %v1170 = vadd.f32 %v1169, %v1107
    %v1171 = vadd.f32 %v1170, %v1108
    %v1172 = vadd.f32 %v1171, %v1109
    %v1173 = vadd.f32 %v1172, %v1110
    %v1174 = vadd.f32 %v1173, %v1111
    %v1175 = vadd.f32 %v1174, %v1112
    %v1176 = vadd.f32 %v1175, %v1113
    %v1177 = vadd.f32 %v1176, %v1114
    %v1178 = vadd.f32 %v1177, %v1115
    %v1179 = vadd.f32 %v1178, %v1116
    %v1180 = vadd.f32 %v1179, %v1117
    %v1181 = vadd.f32 %v1180, %v1118
    %v1182 = vadd.f32 %v1181, %v1119
    %v1183 = vadd.f32 %v1182, %v1120
    %v1184 = vadd.f32 %v1183, %v1121
    %v1185 = vadd.f32 %v1184, %v1122
    %v1186 = vadd.f32 %v1185, %v1123
    %v1187 = vrot.slane %v1186, 4
    %v1188 = vadd.f32 %v1186, %v1187
    %v1189 = vrot.slane %v1188, 2
    %v1190 = vadd.f32 %v1188, %v1189
    %v1191 = vrot.slane %v1190, 1
    %v1192 = vadd.f32 %v1190, %v1191
    %v1193 = vstv %s1059
    %v1194 = vrcp.pop %v1193
    %s1195 = vtos %v1194
    %v1196 = vstv %s1195
    %v1197 = vmul.f32 %v1192, %v1196
    %v1198 = vsub.f32 %v349, %v1197
    %v1199 = vsub.f32 %v354, %v1197
    %v1200 = vsub.f32 %v359, %v1197
    %v1201 = vsub.f32 %v364, %v1197
    %v1202 = vsub.f32 %v369, %v1197
    %v1203 = vsub.f32 %v374, %v1197
    %v1204 = vsub.f32 %v379, %v1197
    %v1205 = vsub.f32 %v384, %v1197
    %v1206 = vsub.f32 %v389, %v1197
    %v1207 = vsub.f32 %v394, %v1197
    %v1208 = vsub.f32 %v399, %v1197
    %v1209 = vsub.f32 %v404, %v1197
    %v1210 = vsub.f32 %v409, %v1197
    %v1211 = vsub.f32 %v414, %v1197
    %v1212 = vsub.f32 %v419, %v1197
    %v1213 = vsub.f32 %v424, %v1197
    %v1214 = vsub.f32 %v429, %v1197
    %v1215 = vsub.f32 %v434, %v1197
    %v1216 = vsub.f32 %v439, %v1197
    %v1217 = vsub.f32 %v444, %v1197
    %v1218 = vsub.f32 %v449, %v1197
    %v1219 = vsub.f32 %v454, %v1197
    %v1220 = vsub.f32 %v459, %v1197
    %v1221 = vsub.f32 %v464, %v1197
    %v1222 = vsub.f32 %v469, %v1197
    %v1223 = vsub.f32 %v474, %v1197
    %v1224 = vsub.f32 %v479, %v1197
    %v1225 = vsub.f32 %v484, %v1197
    %v1226 = vsub.f32 %v489, %v1197
    %v1227 = vsub.f32 %v494, %v1197
    %v1228 = vsub.f32 %v499, %v1197
    %v1229 = vsub.f32 %v504, %v1197
    %v1230 = vsub.f32 %v509, %v1197
    %v1231 = vsub.f32 %v514, %v1197
    %v1232 = vsub.f32 %v519, %v1197
    %v1233 = vsub.f32 %v524, %v1197
    %v1234 = vsub.f32 %v529, %v1197
    %v1235 = vsub.f32 %v534, %v1197
    %v1236 = vsub.f32 %v539, %v1197
    %v1237 = vsub.f32 %v544, %v1197
    %v1238 = vsub.f32 %v549, %v1197
    %v1239 = vsub.f32 %v554, %v1197
    %v1240 = vsub.f32 %v559, %v1197
    %v1241 = vsub.f32 %v564, %v1197
    %v1242 = vsub.f32 %v569, %v1197
    %v1243 = vsub.f32 %v574, %v1197
    %v1244 = vsub.f32 %v579, %v1197
    %v1245 = vsub.f32 %v584, %v1197
    %v1246 = vsub.f32 %v589, %v1197
    %v1247 = vsub.f32 %v594, %v1197
    %v1248 = vsub.f32 %v599, %v1197
    %v1249 = vsub.f32 %v604, %v1197
    %v1250 = vsub.f32 %v609, %v1197
    %v1251 = vsub.f32 %v614, %v1197
    %v1252 = vsub.f32 %v619, %v1197
    %v1253 = vsub.f32 %v624, %v1197
    %v1254 = vsub.f32 %v629, %v1197
    %v1255 = vsub.f32 %v634, %v1197
    %v1256 = vsub.f32 %v639, %v1197
    %v1257 = vsub.f32 %v644, %v1197
    %v1258 = vsub.f32 %v649, %v1197
    %v1259 = vsub.f32 %v654, %v1197
    %v1260 = vsub.f32 %v659, %v1197
    %v1261 = vsub.f32 %v664, %v1197
    %v1262 = vmul.f32 %v1198, %v990
    %v1263 = vmul.f32 %v1199, %v991
    %v1264 = vmul.f32 %v1200, %v992
    %v1265 = vmul.f32 %v1201, %v993
    %v1266 = vmul.f32 %v1202, %v994
    %v1267 = vmul.f32 %v1203, %v995
    %v1268 = vmul.f32 %v1204, %v996
    %v1269 = vmul.f32 %v1205, %v997
    %v1270 = vmul.f32 %v1206, %v998
    %v1271 = vmul.f32 %v1207, %v999
    %v1272 = vmul.f32 %v1208, %v1000
    %v1273 = vmul.f32 %v1209, %v1001
    %v1274 = vmul.f32 %v1210, %v1002
    %v1275 = vmul.f32 %v1211, %v1003
    %v1276 = vmul.f32 %v1212, %v1004
    %v1277 = vmul.f32 %v1213, %v1005
    %v1278 = vmul.f32 %v1214, %v1006
    %v1279 = vmul.f32 %v1215, %v1007
    %v1280 = vmul.f32 %v1216, %v1008
    %v1281 = vmul.f32 %v1217, %v1009
    %v1282 = vmul.f32 %v1218, %v1010
    %v1283 = vmul.f32 %v1219, %v1011
    %v1284 = vmul.f32 %v1220, %v1012
    %v1285 = vmul.f32 %v1221, %v1013
    %v1286 = vmul.f32 %v1222, %v1014
    %v1287 = vmul.f32 %v1223, %v1015
    %v1288 = vmul.f32 %v1224, %v1016
    %v1289 = vmul.f32 %v1225, %v1017
    %v1290 = vmul.f32 %v1226, %v1018
    %v1291 = vmul.f32 %v1227, %v1019
    %v1292 = vmul.f32 %v1228, %v1020
    %v1293 = vmul.f32 %v1229, %v1021
    %v1294 = vmul.f32 %v1230, %v1022
    %v1295 = vmul.f32 %v1231, %v1023
    %v1296 = vmul.f32 %v1232, %v1024
    %v1297 = vmul.f32 %v1233, %v1025
    %v1298 = vmul.f32 %v1234, %v1026
    %v1299 = vmul.f32 %v1235, %v1027
    %v1300 = vmul.f32 %v1236, %v1028
    %v1301 = vmul.f32 %v1237, %v1029
    %v1302 = vmul.f32 %v1238, %v1030
    %v1303 = vmul.f32 %v1239, %v1031
    %v1304 = vmul.f32 %v1240, %v1032
    %v1305 = vmul.f32 %v1241, %v1033
    %v1306 = vmul.f32 %v1242, %v1034
    %v1307 = vmul.f32 %v1243, %v1035
    %v1308 = vmul.f32 %v1244, %v1036
    %v1309 = vmul.f32 %v1245, %v1037
    %v1310 = vmul.f32 %v1246, %v1038
    %v1311 = vmul.f32 %v1247, %v1039
    %v1312 = vmul.f32 %v1248, %v1040
    %v1313 = vmul.f32 %v1249, %v1041
    %v1314 = vmul.f32 %v1250, %v1042
    %v1315 = vmul.f32 %v1251, %v1043
    %v1316 = vmul.f32 %v1252, %v1044
    %v1317 = vmul.f32 %v1253, %v1045
    %v1318 = vmul.f32 %v1254, %v1046
    %v1319 = vmul.f32 %v1255, %v1047
    %v1320 = vmul.f32 %v1256, %v1048
    %v1321 = vmul.f32 %v1257, %v1049
    %v1322 = vmul.f32 %v1258, %v1050
    %v1323 = vmul.f32 %v1259, %v1051
    %v1324 = vmul.f32 %v1260, %v1052
    %v1325 = vmul.f32 %v1261, %v1053
    %v1326 = vmul.f32 %v1262, %v1262
    %v1327 = vmul.f32 %v1263, %v1263
    %v1328 = vmul.f32 %v1264, %v1264
    %v1329 = vmul.f32 %v1265, %v1265
    %v1330 = vmul.f32 %v1266, %v1266
    %v1331 = vmul.f32 %v1267, %v1267
    %v1332 = vmul.f32 %v1268, %v1268
    %v1333 = vmul.f32 %v1269, %v1269
    %v1334 = vmul.f32 %v1270, %v1270
    %v1335 = vmul.f32 %v1271, %v1271
    %v1336 = vmul.f32 %v1272, %v1272
    %v1337 = vmul.f32 %v1273, %v1273
    %v1338 = vmul.f32 %v1274, %v1274
    %v1339 = vmul.f32 %v1275, %v1275
    %v1340 = vmul.f32 %v1276, %v1276
    %v1341 = vmul.f32 %v1277, %v1277
    %v1342 = vmul.f32 %v1278, %v1278
    %v1343 = vmul.f32 %v1279, %v1279
    %v1344 = vmul.f32 %v1280, %v1280
    %v1345 = vmul.f32 %v1281, %v1281
    %v1346 = vmul.f32 %v1282, %v1282
    %v1347 = vmul.f32 %v1283, %v1283
    %v1348 = vmul.f32 %v1284, %v1284
    %v1349 = vmul.f32 %v1285, %v1285
    %v1350 = vmul.f32 %v1286, %v1286
    %v1351 = vmul.f32 %v1287, %v1287
    %v1352 = vmul.f32 %v1288, %v1288
    %v1353 = vmul.f32 %v1289, %v1289
    %v1354 = vmul.f32 %v1290, %v1290
    %v1355 = vmul.f32 %v1291, %v1291
    %v1356 = vmul.f32 %v1292, %v1292
    %v1357 = vmul.f32 %v1293, %v1293
    %v1358 = vmul.f32 %v1294, %v1294
    %v1359 = vmul.f32 %v1295, %v1295
    %v1360 = vmul.f32 %v1296, %v1296
    %v1361 = vmul.f32 %v1297, %v1297
    %v1362 = vmul.f32 %v1298, %v1298
    %v1363 = vmul.f32 %v1299, %v1299
    %v1364 = vmul.f32 %v1300, %v1300
    %v1365 = vmul.f32 %v1301, %v1301
    %v1366 = vmul.f32 %v1302, %v1302
    %v1367 = vmul.f32 %v1303, %v1303
    %v1368 = vmul.f32 %v1304, %v1304
    %v1369 = vmul.f32 %v1305, %v1305
    %v1370 = vmul.f32 %v1306, %v1306
    %v1371 = vmul.f32 %v1307, %v1307
    %v1372 = vmul.f32 %v1308, %v1308
    %v1373 = vmul.f32 %v1309, %v1309
    %v1374 = vmul.f32 %v1310, %v1310
    %v1375 = vmul.f32 %v1311, %v1311
    %v1376 = vmul.f32 %v1312, %v1312
    %v1377 = vmul.f32 %v1313, %v1313
    %v1378 = vmul.f32 %v1314, %v1314
    %v1379 = vmul.f32 %v1315, %v1315
    %v1380 = vmul.f32 %v1316, %v1316
    %v1381 = vmul.f32 %v1317, %v1317
    %v1382 = vmul.f32 %v1318, %v1318
    %v1383 = vmul.f32 %v1319, %v1319
    %v1384 = vmul.f32 %v1320, %v1320
    %v1385 = vmul.f32 %v1321, %v1321
    %v1386 = vmul.f32 %v1322, %v1322
    %v1387 = vmul.f32 %v1323, %v1323
    %v1388 = vmul.f32 %v1324, %v1324
    %v1389 = vmul.f32 %v1325, %v1325
    %v1390 = vadd.f32 %v1326, %v1327
    %v1391 = vadd.f32 %v1390, %v1328
    %v1392 = vadd.f32 %v1391, %v1329
    %v1393 = vadd.f32 %v1392, %v1330
    %v1394 = vadd.f32 %v1393, %v1331
    %v1395 = vadd.f32 %v1394, %v1332
    %v1396 = vadd.f32 %v1395, %v1333
    %v1397 = vadd.f32 %v1396, %v1334
    %v1398 = vadd.f32 %v1397, %v1335
    %v1399 = vadd.f32 %v1398, %v1336
    %v1400 = vadd.f32 %v1399, %v1337
    %v1401 = vadd.f32 %v1400, %v1338
    %v1402 = vadd.f32 %v1401, %v1339
    %v1403 = vadd.f32 %v1402, %v1340
    %v1404 = vadd.f32 %v1403, %v1341
    %v1405 = vadd.f32 %v1404, %v1342
    %v1406 = vadd.f32 %v1405, %v1343
    %v1407 = vadd.f32 %v1406, %v1344
    %v1408 = vadd.f32 %v1407, %v1345
    %v1409 = vadd.f32 %v1408, %v1346
    %v1410 = vadd.f32 %v1409, %v1347
    %v1411 = vadd.f32 %v1410, %v1348
    %v1412 = vadd.f32 %v1411, %v1349
    %v1413 = vadd.f32 %v1412, %v1350
    %v1414 = vadd.f32 %v1413, %v1351
    %v1415 = vadd.f32 %v1414, %v1352
    %v1416 = vadd.f32 %v1415, %v1353
    %v1417 = vadd.f32 %v1416, %v1354
    %v1418 = vadd.f32 %v1417, %v1355
    %v1419 = vadd.f32 %v1418, %v1356
    %v1420 = vadd.f32 %v1419, %v1357
    %v1421 = vadd.f32 %v1420, %v1358
    %v1422 = vadd.f32 %v1421, %v1359
    %v1423 = vadd.f32 %v1422, %v1360
    %v1424 = vadd.f32 %v1423, %v1361
    %v1425 = vadd.f32 %v1424, %v1362
    %v1426 = vadd.f32 %v1425, %v1363
    %v1427 = vadd.f32 %v1426, %v1364
    %v1428 = vadd.f32 %v1427, %v1365
    %v1429 = vadd.f32 %v1428, %v1366
    %v1430 = vadd.f32 %v1429, %v1367
    %v1431 = vadd.f32 %v1430, %v1368
    %v1432 = vadd.f32 %v1431, %v1369
    %v1433 = vadd.f32 %v1432, %v1370
    %v1434 = vadd.f32 %v1433, %v1371
    %v1435 = vadd.f32 %v1434, %v1372
    %v1436 = vadd.f32 %v1435, %v1373
    %v1437 = vadd.f32 %v1436, %v1374
    %v1438 = vadd.f32 %v1437, %v1375
    %v1439 = vadd.f32 %v1438, %v1376
    %v1440 = vadd.f32 %v1439, %v1377
    %v1441 = vadd.f32 %v1440, %v1378
    %v1442 = vadd.f32 %v1441, %v1379
    %v1443 = vadd.f32 %v1442, %v1380
    %v1444 = vadd.f32 %v1443, %v1381
    %v1445 = vadd.f32 %v1444, %v1382
    %v1446 = vadd.f32 %v1445, %v1383
    %v1447 = vadd.f32 %v1446, %v1384
    %v1448 = vadd.f32 %v1447, %v1385
    %v1449 = vadd.f32 %v1448, %v1386
    %v1450 = vadd.f32 %v1449, %v1387
    %v1451 = vadd.f32 %v1450, %v1388
    %v1452 = vadd.f32 %v1451, %v1389
    %v1453 = vrot.slane %v1452, 4
    %v1454 = vadd.f32 %v1452, %v1453
    %v1455 = vrot.slane %v1454, 2
    %v1456 = vadd.f32 %v1454, %v1455
    %v1457 = vrot.slane %v1456, 1
    %v1458 = vadd.f32 %v1456, %v1457
    %1459 = vst [vmem:[#allocation4] sm:$0xff] %v1192
    %1460 = vst [vmem:[#allocation6] sm:$0xff] %v1458
    // Predicated region
    $region10: #{tpu_custom_call.1} parent=1 // pred_check
      _
    $region11: #{tpu_custom_call.1} parent=1 // pred_check_branch
      %1462 = sbr.rel (0) target = $region13
    $region12: #{tpu_custom_call.1} parent=1 // pred_region
      %s1464 = ssub.s32 8192, 8192
      %1465 = vsyncadd [#allocation3], %s1464
      %s1466 = sshll.u32 [#allocation2], 4
      %s1467 = int_to_ptr.vmem [resolvable:$true] %s1466
      %1472 = dma.vmem_to_hbm [thread:$0]  %s1467, 8192, %s2, [#allocation3], 128, 128, 8
    $region13: #{tpu_custom_call.1} parent=1 // pred_fallthru
      _
    // Predicated region
    $region14: #{tpu_custom_call.1} parent=1 // pred_check
      _
    $region15: #{tpu_custom_call.1} parent=1 // pred_check_branch
      %1474 = sbr.rel (0) target = $region17
    $region16: #{tpu_custom_call.1} parent=1 // pred_region
      %s1476 = ssub.s32 128, 128
      %1477 = vsyncadd [#allocation5], %s1476
      %s1479 = sshll.u32 [#allocation4], 4
      %s1480 = int_to_ptr.vmem [resolvable:$true] %s1479
      %1482 = dma.vmem_to_hbm [thread:$0]  %s1480, 128, %s3, [#allocation5]
    $region17: #{tpu_custom_call.1} parent=1 // pred_fallthru
      _
    // Predicated region
    $region18: #{tpu_custom_call.1} parent=1 // pred_check
      _
    $region19: #{tpu_custom_call.1} parent=1 // pred_check_branch
      %1484 = sbr.rel (0) target = $region21
    $region20: #{tpu_custom_call.1} parent=1 // pred_region
      %s1486 = ssub.s32 128, 128
      %1487 = vsyncadd [#allocation5], %s1486
      %s1489 = sshll.u32 [#allocation6], 4
      %s1490 = int_to_ptr.vmem [resolvable:$true] %s1489
      %1492 = dma.vmem_to_hbm [thread:$0]  %s1490, 128, %s4, [#allocation5]
    $region21: #{tpu_custom_call.1} parent=1 // pred_fallthru
      _
    // Predicated region
    $region22: #{tpu_custom_call.1} parent=1 // pred_check
      _
    $region23: #{tpu_custom_call.1} parent=1 // pred_check_branch
      %1494 = sbr.rel (0) target = $region25
    $region24: #{tpu_custom_call.1} parent=1 // pred_region
      %1495 = dma.done [#allocation3], 8192
    $region25: #{tpu_custom_call.1} parent=1 // pred_fallthru
      _
    // Predicated region
    $region26: #{tpu_custom_call.1} parent=1 // pred_check
      _
    $region27: #{tpu_custom_call.1} parent=1 // pred_check_branch
      %1497 = sbr.rel (0) target = $region29
    $region28: #{tpu_custom_call.1} parent=1 // pred_region
      %1498 = dma.done [#allocation5], 128
    $region29: #{tpu_custom_call.1} parent=1 // pred_fallthru
      _
    // Predicated region
    $region30: #{tpu_custom_call.1} parent=1 // pred_check
      _
    $region31: #{tpu_custom_call.1} parent=1 // pred_check_branch
      %1500 = sbr.rel (0) target = $region33
    $region32: #{tpu_custom_call.1} parent=1 // pred_region
      %1501 = dma.done [#allocation5], 128
    $region33: #{tpu_custom_call.1} parent=1 // pred_fallthru
      _
    %1502 = vsyncpa [#allocation3], 1
    %1503 = vsyncpa [#allocation5], 1

</llo_original>
